<compile_context>
chip_gen: v5e
topology: v5e:2x2
jax: 0.10.0
libtpu: 0.0.40
codegen_flags: <defaults>
</compile_context>

<pallas_src>
import functools

import jax
import jax.numpy as jnp
from jax import lax
from jax.experimental import pallas as pl
from jax.experimental.pallas import tpu as pltpu

SOFT_LOCAL_MAX_SIZE = 3
PAD = SOFT_LOCAL_MAX_SIZE // 2


def _vmem_capacity_bytes() -> int:
    """Physical per-core VMEM; conservative 64 MiB fallback (v7x-sized)."""
    try:
        info = pltpu.get_tpu_info()
        cap = getattr(info, "vmem_capacity_bytes", None)
        if cap:
            return int(cap)
    except Exception:
        pass
    return 64 << 20


def _pow2_divisor(n: int) -> int:
    p = 1
    while n % (p * 2) == 0 and p < 512:
        p *= 2
    return p


def _recip(x, fast_ops: bool):
    if fast_ops:
        return pl.reciprocal(x, approx=True)  # EUP vrcp + VALU mul, no long divide
    return 1.0 / x


def _chunk_pass1(xc, ci, chan_off, dw_max, ids, num_channels):
    """Merge one channel chunk into the running channel max / first-argmax."""
    chunk_max = jnp.max(xc, axis=0, keepdims=True)                     # (1, HW)
    local_ids = jnp.min(
        jnp.where(xc == chunk_max, ci, num_channels), axis=0, keepdims=True)
    chunk_ids = local_ids + chan_off                                   # (1, HW)
    take = chunk_max > dw_max          # strict ">" keeps the earliest chunk on ties
    return (jnp.where(take, chunk_max, dw_max),
            jnp.where(take, chunk_ids, ids))


def _chunk_pass2(xc, inv_global, inv_dw_max, masks, best, W, HW, fast_ops):
    """exp, 3x3 pad-with-1 window sum, channel max of the per-chunk scores."""
    w_first, w_last, h_first, h_last = masks
    e = jnp.exp(xc * inv_global)
    if fast_ops:
        left = pltpu.roll(e, shift=1, axis=1)        # e[..., idx-1]
        right = pltpu.roll(e, shift=HW - 1, axis=1)  # e[..., idx+1]
    else:
        left = jnp.roll(e, 1, axis=1)
        right = jnp.roll(e, -1, axis=1)
    row = e + jnp.where(w_first, 1.0, left) + jnp.where(w_last, 1.0, right)
    if fast_ops:
        up = pltpu.roll(row, shift=W, axis=1)        # row one image-row above
        down = pltpu.roll(row, shift=HW - W, axis=1)
    else:
        up = jnp.roll(row, W, axis=1)
        down = jnp.roll(row, -W, axis=1)
    sum_exp = row + jnp.where(h_first, 3.0, up) + jnp.where(h_last, 3.0, down)
    local_max_score = e * _recip(sum_exp, fast_ops)
    all_scores = local_max_score * (xc * inv_dw_max)
    return jnp.maximum(best, jnp.max(all_scores, axis=0, keepdims=True))


def _soft_detection_kernel(x_ref, wpos_ref, hpos_ref, score_ref, ids_ref, *,
                           H, W, c_chunk, n_full, rem, fast_ops):
    C = x_ref.shape[1]
    HW = H * W

    # Edge masks for the pad-with-1.0 window sum (hoisted out of all loops).
    wpos = wpos_ref[...]
    hpos = hpos_ref[...]
    masks = (wpos == 0, wpos == W - 1, hpos == 0, hpos == H - 1)

    align = _pow2_divisor(c_chunk)

    def load_chunk(off, cs):
        xc = x_ref[0, pl.ds(off, cs)]                      # (cs, HW)
        return jnp.maximum(xc.astype(jnp.float32), 0.0)    # F.relu

    base_iota = lax.broadcasted_iota(jnp.int32, (c_chunk, HW), 0)

    # ---- pass 1: channel-wise max / argmax (first maximum, like torch.max) ----
    def p1_body(i, carry):
        dw_max, ids = carry
        off = i * c_chunk
        if align > 1:
            off = pl.multiple_of(off, align)
        xc = load_chunk(off, c_chunk)
        return _chunk_pass1(xc, base_iota, i * c_chunk, dw_max, ids, C)

    dw_max = jnp.full((1, HW), -1.0, dtype=jnp.float32)
    ids = jnp.zeros((1, HW), dtype=jnp.int32)
    dw_max, ids = lax.fori_loop(0, n_full, p1_body, (dw_max, ids),
                                unroll=(n_full <= 8))
    if rem:
        off = n_full * c_chunk
        xr = load_chunk(off, rem)
        rem_iota = lax.broadcasted_iota(jnp.int32, (rem, HW), 0)
        dw_max, ids = _chunk_pass1(xr, rem_iota, off, dw_max, ids, C)

    # Per-sample global max (input is relu'd => max over pixels of dw_max).
    global_max = jnp.max(dw_max)
    inv_global = 1.0 / global_max              # single scalar divide
    inv_dw_max = _recip(dw_max, fast_ops)      # one (1, HW) reciprocal, reused

    # ---- pass 2: exp, 3x3 pad-with-1 window sum, channel max of the scores ----
    def p2_body(i, best):
        off = i * c_chunk
        if align > 1:
            off = pl.multiple_of(off, align)
        xc = load_chunk(off, c_chunk)
        return _chunk_pass2(xc, inv_global, inv_dw_max, masks, best, W, HW, fast_ops)

    best = lax.fori_loop(0, n_full, p2_body, jnp.zeros((1, HW), jnp.float32),
                         unroll=(n_full <= 8))
    if rem:
        xr = load_chunk(n_full * c_chunk, rem)
        best = _chunk_pass2(xr, inv_global, inv_dw_max, masks, best, W, HW, fast_ops)

    # Per-sample normalization over the spatial dims.
    score = best * (1.0 / jnp.sum(best))

    score_ref[...] = score[None].astype(score_ref.dtype)   # (1, 1, HW) lane-dense
    # TODO(synk): torch.max returns int64 indices; int32 is used here.
    ids_ref[...] = ids[None].astype(ids_ref.dtype)


@functools.partial(jax.jit, static_argnames=("fast_ops",))
def _soft_detection_jit(batch, fast_ops):
    B, C, H, W = batch.shape
    HW = H * W
    x2 = batch.reshape(B, C, HW)                 # lane-dense spatial layout

    # Precomputed (w, h) index rows -> edge masks in-kernel without mod/reshape.
    wpos = jnp.tile(jnp.arange(W, dtype=jnp.int32), H).reshape(1, HW)
    hpos = jnp.repeat(jnp.arange(H, dtype=jnp.int32), W).reshape(1, HW)

    # ---- VMEM / chunk planning (all static Python) ----
    itemsize = jnp.dtype(batch.dtype).itemsize
    budget = max(_vmem_capacity_bytes() - (8 << 20), 16 << 20)

    input_block = C * HW * itemsize
    # Single-buffer the resident sample if double-buffering it would be >1/2 budget.
    input_buffers = 2 if 2 * input_block <= budget // 2 else 1

    per_chan = 10 * HW * 4                       # ~10 live f32 rows per channel
    fixed = input_buffers * input_block + 8 * HW * 4 + (2 << 20)
    avail = max(budget - fixed, per_chan)
    c_chunk = min(C, max(int(avail // per_chan), 1))
    if c_chunk < C and c_chunk >= 8:
        c_chunk = (c_chunk // 8) * 8             # sublane-aligned chunks
    n_full, rem = divmod(C, c_chunk)

    vmem_limit = int(min(budget, max(fixed + 12 * c_chunk * HW * 4, 32 << 20)))

    if input_buffers == 1:
        x_spec = pl.BlockSpec((1, C, HW), lambda b: (b, 0, 0),
                              pipeline_mode=pl.Buffered(1))
    else:
        x_spec = pl.BlockSpec((1, C, HW), lambda b: (b, 0, 0))

    # TODO(synk): for B==1 on v7x (2 TensorCores) add a second parallel grid
    # axis over H (with a +-1 row halo) plus a small combine step.
    grid_spec = pltpu.PrefetchScalarGridSpec(
        num_scalar_prefetch=0,
        grid=(B,),
        in_specs=[x_spec,
                  pl.BlockSpec((1, HW), lambda b: (0, 0)),
                  pl.BlockSpec((1, HW), lambda b: (0, 0))],
        out_specs=[pl.BlockSpec((1, 1, HW), lambda b: (b, 0, 0)),
                   pl.BlockSpec((1, 1, HW), lambda b: (b, 0, 0))],
    )
    score, ids = pl.pallas_call(
        functools.partial(_soft_detection_kernel, H=H, W=W, c_chunk=c_chunk,
                          n_full=n_full, rem=rem, fast_ops=fast_ops),
        grid_spec=grid_spec,
        out_shape=(
            jax.ShapeDtypeStruct((B, 1, HW), jnp.float32),
            jax.ShapeDtypeStruct((B, 1, HW), jnp.int32),
        ),
        compiler_params=pltpu.CompilerParams(
            dimension_semantics=("parallel",),
            vmem_limit_bytes=vmem_limit),
    )(x2, wpos, hpos)

    return score.reshape(B, 1, H, W), ids.reshape(B, 1, H, W)


_FAST_OPS_OK = None   # decided lazily on the first call (no import-time probe)


def soft_detection(batch):
    """Public entry point. Prefers the Mosaic fast path (XLU rolls + EUP
    reciprocals); falls back lazily to portable ops only if compiling the
    real kernel with them fails in this environment."""
    global _FAST_OPS_OK
    if _FAST_OPS_OK is None:
        if jax.default_backend() != "tpu":
            _FAST_OPS_OK = False
        else:
            try:
                out = _soft_detection_jit(batch, fast_ops=True)
                jax.block_until_ready(out)
                _FAST_OPS_OK = True
                return out
            except Exception:
                _FAST_OPS_OK = False   # lowering rejected the fast ops here
    return _soft_detection_jit(batch, fast_ops=_FAST_OPS_OK)


def _reference(batch):
    """Pure-JAX mirror of the PyTorch SoftDetectionModule.forward."""
    b = batch.shape[0]
    x = jnp.maximum(batch, 0.0)
    max_per_sample = jnp.max(x.reshape(b, -1), axis=1).reshape(b, 1, 1, 1)
    exp = jnp.exp(x / max_per_sample)
    padded = jnp.pad(exp, ((0, 0), (0, 0), (PAD, PAD), (PAD, PAD)),
                     mode="constant", constant_values=1.0)
    H, W = x.shape[2], x.shape[3]
    sum_exp = sum(padded[:, :, di:di + H, dj:dj + W]
                  for di in range(SOFT_LOCAL_MAX_SIZE)
                  for dj in range(SOFT_LOCAL_MAX_SIZE))
    local_max_score = exp / sum_exp
    dw_max = jnp.max(x, axis=1, keepdims=True)
    ids = jnp.argmax(x, axis=1)[:, None].astype(jnp.int32)
    dw_score = x / dw_max
    all_scores = local_max_score * dw_score
    score = jnp.max(all_scores, axis=1, keepdims=True)
    score = score / jnp.sum(score.reshape(b, -1), axis=1).reshape(b, 1, 1, 1)
    return score, ids


if __name__ == "__main__":
    key = jax.random.PRNGKey(0)
    B, C, H, W = 2, 4, 16, 16
    x = jax.random.normal(key, (B, C, H, W), dtype=jnp.float32)
    # Keep one channel strictly positive at every pixel so the module's own
    # 0/0 path (depth_wise_max == 0 after ReLU) -- which yields NaN in PyTorch
    # as well -- is not exercised by the test data.
    x = x.at[:, 0].set(jnp.abs(x[:, 0]) + 0.1)

    score, ids = soft_detection(x)
    jax.block_until_ready((score, ids))

    ref_score, ref_ids = _reference(x)
    assert score.shape == (B, 1, H, W) and ids.shape == (B, 1, H, W)
    assert bool(jnp.all(jnp.isfinite(score)))
    # Tolerance accounts for the approximate (EUP) reciprocals used on-TPU.
    assert jnp.allclose(score, ref_score, rtol=1e-2, atol=1e-6)
    assert jnp.allclose(jnp.sum(score.reshape(B, -1), axis=1), 1.0, atol=1e-4)
    assert jnp.array_equal(ids, ref_ids)

    print("KERNEL_OK")
</pallas_src>

<mosaic_0001>
module attributes {stable_mosaic.version = 11 : i64} {
  func.func @_soft_detection_kernel(%arg0: i32, %arg1: memref<1x4x256xf32, #tpu.memory_space<vmem>>, %arg2: memref<1x256xi32, #tpu.memory_space<vmem>>, %arg3: memref<1x256xi32, #tpu.memory_space<vmem>>, %arg4: memref<1x1x256xf32, #tpu.memory_space<vmem>>, %arg5: memref<1x1x256xi32, #tpu.memory_space<vmem>>) attributes {dimension_semantics = [#tpu.dimension_semantics<parallel>], iteration_bounds = array<i64: 2>, scalar_prefetch = 0 : i64, scratch_operands = 0 : i64, tpu.core_type = #tpu.core_type<tc>, window_params = [{transform_indices = @transform_0, window_bounds = array<i64: 1, 4, 256>}, {pipeline_mode = #tpu.pipeline_mode<synchronous>, transform_indices = @transform_1, window_bounds = array<i64: 1, 256>}, {pipeline_mode = #tpu.pipeline_mode<synchronous>, transform_indices = @transform_2, window_bounds = array<i64: 1, 256>}, {transform_indices = @transform_3, window_bounds = array<i64: 1, 1, 256>}, {transform_indices = @transform_4, window_bounds = array<i64: 1, 1, 256>}]} {
    %c0 = arith.constant 0 : index
    %c0_0 = arith.constant 0 : index
    %0 = vector.load %arg2[%c0, %c0_0] : memref<1x256xi32, #tpu.memory_space<vmem>>, vector<1x256xi32>
    %c0_1 = arith.constant 0 : index
    %c0_2 = arith.constant 0 : index
    %1 = vector.load %arg3[%c0_1, %c0_2] : memref<1x256xi32, #tpu.memory_space<vmem>>, vector<1x256xi32>
    %c0_i32 = arith.constant 0 : i32
    %2 = vector.broadcast %c0_i32 : i32 to vector<1x256xi32>
    %3 = arith.cmpi eq, %0, %2 : vector<1x256xi32>
    %c15_i32 = arith.constant 15 : i32
    %4 = vector.broadcast %c15_i32 : i32 to vector<1x256xi32>
    %5 = arith.cmpi eq, %0, %4 : vector<1x256xi32>
    %c0_i32_3 = arith.constant 0 : i32
    %6 = vector.broadcast %c0_i32_3 : i32 to vector<1x256xi32>
    %7 = arith.cmpi eq, %1, %6 : vector<1x256xi32>
    %c15_i32_4 = arith.constant 15 : i32
    %8 = vector.broadcast %c15_i32_4 : i32 to vector<1x256xi32>
    %9 = arith.cmpi eq, %1, %8 : vector<1x256xi32>
    %10 = tpu.iota {dimensions = array<i32: 0>} : vector<4x256xi32>
    %cst = arith.constant -1.000000e+00 : f32
    %11 = vector.broadcast %cst : f32 to vector<1x256xf32>
    %c0_i32_5 = arith.constant 0 : i32
    %12 = vector.broadcast %c0_i32_5 : i32 to vector<1x256xi32>
    %c0_i32_6 = arith.constant 0 : i32
    %c4_i32 = arith.constant 4 : i32
    %13 = arith.muli %c0_i32_6, %c4_i32 : i32
    %14 = tpu.assume_multiple %13, 4 : i32
    %c0_7 = arith.constant 0 : index
    %15 = arith.index_cast %14 : i32 to index
    %c0_8 = arith.constant 0 : index
    %16 = vector.load %arg1[%c0_7, %15, %c0_8] : memref<1x4x256xf32, #tpu.memory_space<vmem>>, vector<1x4x256xf32>
    %17 = vector.shape_cast %16 : vector<1x4x256xf32> to vector<4x256xf32>
    %cst_9 = arith.constant 0.000000e+00 : f32
    %18 = vector.broadcast %cst_9 : f32 to vector<4x256xf32>
    %19 = arith.maximumf %17, %18 : vector<4x256xf32>
    %c4_i32_10 = arith.constant 4 : i32
    %20 = arith.muli %c0_i32_6, %c4_i32_10 : i32
    %cst_11 = arith.constant dense<0xFF800000> : vector<256xf32>
    %21 = vector.multi_reduction <maximumf>, %19, %cst_11 [0] : vector<4x256xf32> to vector<256xf32>
    %22 = vector.shape_cast %21 : vector<256xf32> to vector<1x256xf32>
    %23 = vector.broadcast %22 : vector<1x256xf32> to vector<4x256xf32>
    %24 = arith.cmpf oeq, %19, %23 : vector<4x256xf32>
    %c4_i32_12 = arith.constant 4 : i32
    %25 = vector.broadcast %c4_i32_12 : i32 to vector<4x256xi32>
    %26 = arith.select %24, %10, %25 : vector<4x256xi1>, vector<4x256xi32>
    %cst_13 = arith.constant dense<2147483647> : vector<256xi32>
    %27 = vector.multi_reduction <minsi>, %26, %cst_13 [0] : vector<4x256xi32> to vector<256xi32>
    %28 = vector.shape_cast %27 : vector<256xi32> to vector<1x256xi32>
    %29 = vector.broadcast %20 : i32 to vector<1x256xi32>
    %30 = arith.addi %28, %29 : vector<1x256xi32>
    %31 = arith.cmpf ogt, %22, %11 : vector<1x256xf32>
    %32 = arith.select %31, %22, %11 : vector<1x256xi1>, vector<1x256xf32>
    %33 = arith.select %31, %30, %12 : vector<1x256xi1>, vector<1x256xi32>
    %c1_i32 = arith.constant 1 : i32
    %34 = vector.shape_cast %32 : vector<1x256xf32> to vector<1x1x256xf32>
    %cst_14 = arith.constant dense<0xFF800000> : vector<1xf32>
    %35 = vector.multi_reduction <maximumf>, %34, %cst_14 [1, 2] : vector<1x1x256xf32> to vector<1xf32>
    %36 = vector.shape_cast %35 : vector<1xf32> to vector<1x1x1xf32>
    %37 = vector.extract %36[0, 0, 0] : f32 from vector<1x1x1xf32>
    %cst_15 = arith.constant 1.000000e+00 : f32
    %38 = arith.divf %cst_15, %37 : f32
    %cst_16 = arith.constant 1.000000e+00 : f32
    %39 = vector.broadcast %cst_16 : f32 to vector<1x256xf32>
    %40 = arith.divf %39, %32 : vector<1x256xf32>
    %cst_17 = arith.constant 0.000000e+00 : f32
    %41 = vector.broadcast %cst_17 : f32 to vector<1x256xf32>
    %c0_i32_18 = arith.constant 0 : i32
    %c4_i32_19 = arith.constant 4 : i32
    %42 = arith.muli %c0_i32_18, %c4_i32_19 : i32
    %43 = tpu.assume_multiple %42, 4 : i32
    %c0_20 = arith.constant 0 : index
    %44 = arith.index_cast %43 : i32 to index
    %c0_21 = arith.constant 0 : index
    %45 = vector.load %arg1[%c0_20, %44, %c0_21] : memref<1x4x256xf32, #tpu.memory_space<vmem>>, vector<1x4x256xf32>
    %46 = vector.shape_cast %45 : vector<1x4x256xf32> to vector<4x256xf32>
    %cst_22 = arith.constant 0.000000e+00 : f32
    %47 = vector.broadcast %cst_22 : f32 to vector<4x256xf32>
    %48 = arith.maximumf %46, %47 : vector<4x256xf32>
    %49 = vector.broadcast %38 : f32 to vector<4x256xf32>
    %50 = arith.mulf %48, %49 : vector<4x256xf32>
    %51 = math.exp %50 : vector<4x256xf32>
    %52 = vector.extract_strided_slice %51 {offsets = [0, 255], sizes = [4, 1], strides = [1, 1]} : vector<4x256xf32> to vector<4x1xf32>
    %53 = vector.extract_strided_slice %51 {offsets = [0, 0], sizes = [4, 255], strides = [1, 1]} : vector<4x256xf32> to vector<4x255xf32>
    %54 = tpu.concatenate %52, %53 in 1 : vector<4x1xf32>, vector<4x255xf32> -> vector<4x256xf32>
    %55 = vector.extract_strided_slice %51 {offsets = [0, 1], sizes = [4, 255], strides = [1, 1]} : vector<4x256xf32> to vector<4x255xf32>
    %56 = vector.extract_strided_slice %51 {offsets = [0, 0], sizes = [4, 1], strides = [1, 1]} : vector<4x256xf32> to vector<4x1xf32>
    %57 = tpu.concatenate %55, %56 in 1 : vector<4x255xf32>, vector<4x1xf32> -> vector<4x256xf32>
    %cst_23 = arith.constant 1.000000e+00 : f32
    %58 = vector.shape_cast %3 : vector<1x256xi1> to vector<1x256xi1>
    %59 = vector.broadcast %58 : vector<1x256xi1> to vector<4x256xi1>
    %60 = vector.broadcast %cst_23 : f32 to vector<4x256xf32>
    %61 = arith.select %59, %60, %54 : vector<4x256xi1>, vector<4x256xf32>
    %62 = arith.addf %51, %61 : vector<4x256xf32>
    %cst_24 = arith.constant 1.000000e+00 : f32
    %63 = vector.shape_cast %5 : vector<1x256xi1> to vector<1x256xi1>
    %64 = vector.broadcast %63 : vector<1x256xi1> to vector<4x256xi1>
    %65 = vector.broadcast %cst_24 : f32 to vector<4x256xf32>
    %66 = arith.select %64, %65, %57 : vector<4x256xi1>, vector<4x256xf32>
    %67 = arith.addf %62, %66 : vector<4x256xf32>
    %68 = vector.extract_strided_slice %67 {offsets = [0, 240], sizes = [4, 16], strides = [1, 1]} : vector<4x256xf32> to vector<4x16xf32>
    %69 = vector.extract_strided_slice %67 {offsets = [0, 0], sizes = [4, 240], strides = [1, 1]} : vector<4x256xf32> to vector<4x240xf32>
    %70 = tpu.concatenate %68, %69 in 1 : vector<4x16xf32>, vector<4x240xf32> -> vector<4x256xf32>
    %71 = vector.extract_strided_slice %67 {offsets = [0, 16], sizes = [4, 240], strides = [1, 1]} : vector<4x256xf32> to vector<4x240xf32>
    %72 = vector.extract_strided_slice %67 {offsets = [0, 0], sizes = [4, 16], strides = [1, 1]} : vector<4x256xf32> to vector<4x16xf32>
    %73 = tpu.concatenate %71, %72 in 1 : vector<4x240xf32>, vector<4x16xf32> -> vector<4x256xf32>
    %cst_25 = arith.constant 3.000000e+00 : f32
    %74 = vector.shape_cast %7 : vector<1x256xi1> to vector<1x256xi1>
    %75 = vector.broadcast %74 : vector<1x256xi1> to vector<4x256xi1>
    %76 = vector.broadcast %cst_25 : f32 to vector<4x256xf32>
    %77 = arith.select %75, %76, %70 : vector<4x256xi1>, vector<4x256xf32>
    %78 = arith.addf %67, %77 : vector<4x256xf32>
    %cst_26 = arith.constant 3.000000e+00 : f32
    %79 = vector.shape_cast %9 : vector<1x256xi1> to vector<1x256xi1>
    %80 = vector.broadcast %79 : vector<1x256xi1> to vector<4x256xi1>
    %81 = vector.broadcast %cst_26 : f32 to vector<4x256xf32>
    %82 = arith.select %80, %81, %73 : vector<4x256xi1>, vector<4x256xf32>
    %83 = arith.addf %78, %82 : vector<4x256xf32>
    %cst_27 = arith.constant 1.000000e+00 : f32
    %84 = vector.broadcast %cst_27 : f32 to vector<4x256xf32>
    %85 = arith.divf %84, %83 : vector<4x256xf32>
    %86 = arith.mulf %51, %85 : vector<4x256xf32>
    %87 = vector.broadcast %40 : vector<1x256xf32> to vector<4x256xf32>
    %88 = arith.mulf %48, %87 : vector<4x256xf32>
    %89 = arith.mulf %86, %88 : vector<4x256xf32>
    %cst_28 = arith.constant dense<0xFF800000> : vector<256xf32>
    %90 = vector.multi_reduction <maximumf>, %89, %cst_28 [0] : vector<4x256xf32> to vector<256xf32>
    %91 = vector.shape_cast %90 : vector<256xf32> to vector<1x256xf32>
    %92 = arith.maximumf %41, %91 : vector<1x256xf32>
    %c1_i32_29 = arith.constant 1 : i32
    %93 = vector.shape_cast %92 : vector<1x256xf32> to vector<1x1x256xf32>
    %cst_30 = arith.constant dense<0.000000e+00> : vector<1xf32>
    %94 = vector.multi_reduction <add>, %93, %cst_30 [1, 2] : vector<1x1x256xf32> to vector<1xf32>
    %95 = vector.shape_cast %94 : vector<1xf32> to vector<1x1x1xf32>
    %96 = vector.extract %95[0, 0, 0] : f32 from vector<1x1x1xf32>
    %cst_31 = arith.constant 1.000000e+00 : f32
    %97 = arith.divf %cst_31, %96 : f32
    %98 = vector.broadcast %97 : f32 to vector<1x256xf32>
    %99 = arith.mulf %92, %98 : vector<1x256xf32>
    %100 = vector.shape_cast %99 : vector<1x256xf32> to vector<1x1x256xf32>
    %c0_32 = arith.constant 0 : index
    %c0_33 = arith.constant 0 : index
    %c0_34 = arith.constant 0 : index
    %101 = vector.load %arg4[%c0_32, %c0_33, %c0_34] : memref<1x1x256xf32, #tpu.memory_space<vmem>>, vector<1x1x256xf32>
    tpu.vector_store %arg4[%c0_32, %c0_33, %c0_34], %100 {strides = array<i32>} : memref<1x1x256xf32, #tpu.memory_space<vmem>>, vector<1x1x256xf32>,
    %102 = vector.shape_cast %33 : vector<1x256xi32> to vector<1x1x256xi32>
    %c0_35 = arith.constant 0 : index
    %c0_36 = arith.constant 0 : index
    %c0_37 = arith.constant 0 : index
    %103 = vector.load %arg5[%c0_35, %c0_36, %c0_37] : memref<1x1x256xi32, #tpu.memory_space<vmem>>, vector<1x1x256xi32>
    tpu.vector_store %arg5[%c0_35, %c0_36, %c0_37], %102 {strides = array<i32>} : memref<1x1x256xi32, #tpu.memory_space<vmem>>, vector<1x1x256xi32>,
    return
  }
  func.func @transform_0(%arg0: i32) -> (i32, i32, i32) {
    %c0_i32 = arith.constant 0 : i32
    %c0_i32_0 = arith.constant 0 : i32
    %c0_i32_1 = arith.constant 0 : i32
    return %arg0, %c0_i32, %c0_i32_0 : i32, i32, i32
  }
  func.func @transform_1(%arg0: i32) -> (i32, i32) {
    %c0_i32 = arith.constant 0 : i32
    %c0_i32_0 = arith.constant 0 : i32
    %c0_i32_1 = arith.constant 0 : i32
    return %c0_i32, %c0_i32_0 : i32, i32
  }
  func.func @transform_2(%arg0: i32) -> (i32, i32) {
    %c0_i32 = arith.constant 0 : i32
    %c0_i32_0 = arith.constant 0 : i32
    %c0_i32_1 = arith.constant 0 : i32
    return %c0_i32, %c0_i32_0 : i32, i32
  }
  func.func @transform_3(%arg0: i32) -> (i32, i32, i32) {
    %c0_i32 = arith.constant 0 : i32
    %c0_i32_0 = arith.constant 0 : i32
    %c0_i32_1 = arith.constant 0 : i32
    return %arg0, %c0_i32, %c0_i32_0 : i32, i32, i32
  }
  func.func @transform_4(%arg0: i32) -> (i32, i32, i32) {
    %c0_i32 = arith.constant 0 : i32
    %c0_i32_0 = arith.constant 0 : i32
    %c0_i32_1 = arith.constant 0 : i32
    return %arg0, %c0_i32, %c0_i32_0 : i32, i32, i32
  }
}

</mosaic_0001>

<llo_original>
// kernel: tile.9
$region0: #{tile.9}
  %s0 = inlined_call_operand.vmem [shape: s32[16,16], index: 0, kind: input, shape index: {}]
  %s1 = inlined_call_operand.vmem [shape: s32[1,256], index: 1, kind: output, shape index: {}]
  $region1: #{tile.9} parent=0
    #allocation0 [shape = 'u8[8192]{0}', space=vmem, size = 0x2000, scoped, tag = 'scoped mem for output reshape']
    %s2 = smov 3
    %v3 = vld [vmem:[%s0] ss:$8 sm:%s2]
    %vm4 = vcmask 130048
    %5 = vst.msk [vmem:[#allocation0] ss:$8 sm:$0x3] %vm4, %v3
    %s6 = scalar_lea.vmem %s0, 7
    %s7 = smov 3
    %v8 = vld [vmem:[%s6] ss:$8 sm:%s7]
    %9 = vrot.lane.b32.xlu0 %v8, 112
    %v10 = vpop.permute.xlu0 %9
    %vm11 = vcmask 1048448
    %12 = vst.msk [vmem:[#allocation0] ss:$8 sm:$0x3] %vm11, %v10
    %s13 = scalar_lea.vmem %s0, 6
    %s14 = smov 3
    %v15 = vld [vmem:[%s13] ss:$8 sm:%s14]
    %16 = vrot.lane.b32.xlu0 %v15, 96
    %v17 = vpop.permute.xlu0 %16
    %vm18 = vcmask 917248
    %19 = vst.msk [vmem:[#allocation0] ss:$8 sm:$0x3] %vm18, %v17
    %s20 = scalar_lea.vmem %s0, 5
    %s21 = smov 3
    %v22 = vld [vmem:[%s20] ss:$8 sm:%s21]
    %23 = vrot.lane.b32.xlu0 %v22, 80
    %v24 = vpop.permute.xlu0 %23
    %vm25 = vcmask 786048
    %26 = vst.msk [vmem:[#allocation0] ss:$8 sm:$0x3] %vm25, %v24
    %s27 = scalar_lea.vmem %s0, 4
    %s28 = smov 3
    %v29 = vld [vmem:[%s27] ss:$8 sm:%s28]
    %30 = vrot.lane.b32.xlu0 %v29, 64
    %v31 = vpop.permute.xlu0 %30
    %vm32 = vcmask 654848
    %33 = vst.msk [vmem:[#allocation0] ss:$8 sm:$0x3] %vm32, %v31
    %s34 = scalar_lea.vmem %s0, 3
    %s35 = smov 3
    %v36 = vld [vmem:[%s34] ss:$8 sm:%s35]
    %37 = vrot.lane.b32.xlu0 %v36, 48
    %v38 = vpop.permute.xlu0 %37
    %vm39 = vcmask 523648
    %40 = vst.msk [vmem:[#allocation0] ss:$8 sm:$0x3] %vm39, %v38
    %s41 = scalar_lea.vmem %s0, 2
    %s42 = smov 3
    %v43 = vld [vmem:[%s41] ss:$8 sm:%s42]
    %44 = vrot.lane.b32.xlu0 %v43, 32
    %v45 = vpop.permute.xlu0 %44
    %vm46 = vcmask 392448
    %47 = vst.msk [vmem:[#allocation0] ss:$8 sm:$0x3] %vm46, %v45
    %s48 = scalar_lea.vmem %s0, 1
    %s49 = smov 3
    %v50 = vld [vmem:[%s48] ss:$8 sm:%s49]
    %51 = vrot.lane.b32.xlu0 %v50, 16
    %v52 = vpop.permute.xlu0 %51
    %vm53 = vcmask 261248
    %54 = vst.msk [vmem:[#allocation0] ss:$8 sm:$0x3] %vm53, %v52
    %s56 = ssub.s32 2, 1
    %v57 = vld [vmem:[#allocation0] sm:%s56]
    %s59 = ssub.s32 2, 1
    %60 = vst [vmem:[%s1] sm:%s59] %v57
    %s61 = scalar_lea.vmem [#allocation0], 8
    %v62 = vld [vmem:[%s61] sm:%s56]
    %s64 = ssub.s32 2, 1
    %s65 = scalar_lea.vmem %s1, 1
    %66 = vst [vmem:[%s65] sm:%s64] %v62

// kernel: _soft_detection_jit.1
$region0: #{_soft_detection_jit.1}
  #allocation0 [shape = 'u32[]', space=smem, size = 0x4, offset = 0x4, fixed_abs, tag = 'smem constant byte address 0x4 - core index']
  #allocation1 [shape = 'u32[72,128]{1,0:T(1,128)}', space=vmem, size = 0x9000, scoped, tag = 'internal scratch']
  %s0 = inlined_call_operand.vmem [shape: f32[2,4,256], index: 0, kind: input, shape index: {}]
  %s1 = inlined_call_operand.vmem [shape: s32[1,256], index: 1, kind: input, shape index: {}]
  %s2 = inlined_call_operand.vmem [shape: s32[1,256], index: 2, kind: input, shape index: {}]
  %s3 = inlined_call_operand.vmem [shape: f32[2,1,256], index: 3, kind: output, shape index: {0}]
  %s4 = inlined_call_operand.vmem [shape: s32[2,1,256], index: 4, kind: output, shape index: {1}]
  %5 = xla_tuple %s3, %s4
  %s6 = sld [smem:[#allocation0]]
  $region53: #{_soft_detection_jit.1} parent=0
    _
  %s8 = ssub.s32 1, %s6
  %s9 = scalar_select 0, %s8, %s6
  loop: start=0, step=1, limit=4
  $region2: #{_soft_detection_jit.1} parent=0 // loop_pre_header
    _
  $region3: #{_soft_detection_jit.1} parent=0 // loop_header
    %s11 = sphi 0, %s15
    %p12 = scmp.ge.s32.totalorder %s11, 4
    %s21 = sphi 0, %s23
    %s24 = sphi 0, %s21
    %s25 = sphi 0, %s24
    %s41 = sphi 0, %s25
    %s45 = sphi 0, %s45
    %s47 = sphi 0, %s45
    %s48 = sphi 0, %s47
    %s62 = sphi 0, %s48
    %s66 = sphi 0, %s66
    %s68 = sphi 0, %s66
    %s69 = sphi 0, %s68
    %s83 = sphi 0, %s69
    %s89 = sphi 0, %s91
    %s92 = sphi 0, %s89
    %s93 = sphi 0, %s92
    %s109 = sphi 0, %s93
    %s115 = sphi 0, %s117
    %s118 = sphi 0, %s115
    %s119 = sphi 0, %s118
    %s135 = sphi 0, %s119
  $region4: #{_soft_detection_jit.1} parent=0 // loop_header_branch
    %14 = sbr.rel (%p12) target = $region8
  $region5: #{_soft_detection_jit.1} parent=0 // loop_body
    %s16 = ssub.s32 %s11, 1
    %s17 = ssub.s32 %s11, 2
    %s18 = sadd.s32 %s11, 1
    %s19 = ssub.s32 %s11, %s18
    %p20 = scmp.eq.s32.totalorder %s19, 0
    %s22 = sadd.s32 %s21, 1
    %s23 = scalar_select %p20, %s21, %s22
    %p26 = pneg %p20
    %p27 = scmp.eq.s32.totalorder %s11, 1
    %p28 = por %p26, %p27
    %p29 = scmp.ne.s32.totalorder %s21, %s24
    %p30 = scmp.eq.s32.totalorder %s11, 0
    %p31 = por %p29, %p30
    %p32 = scmp.ne.s32.totalorder %s21, %s24
    %p33 = scmp.eq.s32.totalorder %s16, 1
    %p34 = por %p32, %p33
    %p35 = scmp.ne.s32.totalorder %s24, %s25
    %p36 = scmp.eq.s32.totalorder %s16, 0
    %p37 = por %p35, %p36
    %p38 = scmp.ne.s32.totalorder %s24, %s25
    %p39 = scmp.eq.s32.totalorder %s17, 1
    %p40 = por %p38, %p39
    %p42 = scmp.ne.s32.totalorder %s25, %s41
    %p43 = scmp.eq.s32.totalorder %s17, 0
    %p44 = por %p42, %p43
    %s46 = sadd.s32 %s45, 1
    %p49 = scmp.eq.s32.totalorder %s11, 1
    %p50 = scmp.ne.s32.totalorder %s45, %s47
    %p51 = scmp.eq.s32.totalorder %s11, 0
    %p52 = por %p50, %p51
    %p53 = scmp.ne.s32.totalorder %s45, %s47
    %p54 = scmp.eq.s32.totalorder %s16, 1
    %p55 = por %p53, %p54
    %p56 = scmp.ne.s32.totalorder %s47, %s48
    %p57 = scmp.eq.s32.totalorder %s16, 0
    %p58 = por %p56, %p57
    %p59 = scmp.ne.s32.totalorder %s47, %s48
    %p60 = scmp.eq.s32.totalorder %s17, 1
    %p61 = por %p59, %p60
    %p63 = scmp.ne.s32.totalorder %s48, %s62
    %p64 = scmp.eq.s32.totalorder %s17, 0
    %p65 = por %p63, %p64
    %s67 = sadd.s32 %s66, 1
    %p70 = scmp.eq.s32.totalorder %s11, 1
    %p71 = scmp.ne.s32.totalorder %s66, %s68
    %p72 = scmp.eq.s32.totalorder %s11, 0
    %p73 = por %p71, %p72
    %p74 = scmp.ne.s32.totalorder %s66, %s68
    %p75 = scmp.eq.s32.totalorder %s16, 1
    %p76 = por %p74, %p75
    %p77 = scmp.ne.s32.totalorder %s68, %s69
    %p78 = scmp.eq.s32.totalorder %s16, 0
    %p79 = por %p77, %p78
    %p80 = scmp.ne.s32.totalorder %s68, %s69
    %p81 = scmp.eq.s32.totalorder %s17, 1
    %p82 = por %p80, %p81
    %p84 = scmp.ne.s32.totalorder %s69, %s83
    %p85 = scmp.eq.s32.totalorder %s17, 0
    %p86 = por %p84, %p85
    %s87 = ssub.s32 %s11, %s18
    %p88 = scmp.eq.s32.totalorder %s87, 0
    %s90 = sadd.s32 %s89, 1
    %s91 = scalar_select %p88, %s89, %s90
    %p94 = pneg %p88
    %p95 = scmp.eq.s32.totalorder %s11, 1
    %p96 = por %p94, %p95
    %p97 = scmp.ne.s32.totalorder %s89, %s92
    %p98 = scmp.eq.s32.totalorder %s11, 0
    %p99 = por %p97, %p98
    %p100 = scmp.ne.s32.totalorder %s89, %s92
    %p101 = scmp.eq.s32.totalorder %s16, 1
    %p102 = por %p100, %p101
    %p103 = scmp.ne.s32.totalorder %s92, %s93
    %p104 = scmp.eq.s32.totalorder %s16, 0
    %p105 = por %p103, %p104
    %p106 = scmp.ne.s32.totalorder %s92, %s93
    %p107 = scmp.eq.s32.totalorder %s17, 1
    %p108 = por %p106, %p107
    %p110 = scmp.ne.s32.totalorder %s93, %s109
    %p111 = scmp.eq.s32.totalorder %s17, 0
    %p112 = por %p110, %p111
    %s113 = ssub.s32 %s11, %s18
    %p114 = scmp.eq.s32.totalorder %s113, 0
    %s116 = sadd.s32 %s115, 1
    %s117 = scalar_select %p114, %s115, %s116
    %p120 = pneg %p114
    %p121 = scmp.eq.s32.totalorder %s11, 1
    %p122 = por %p120, %p121
    %p123 = scmp.ne.s32.totalorder %s115, %s118
    %p124 = scmp.eq.s32.totalorder %s11, 0
    %p125 = por %p123, %p124
    %p126 = scmp.ne.s32.totalorder %s115, %s118
    %p127 = scmp.eq.s32.totalorder %s16, 1
    %p128 = por %p126, %p127
    %p129 = scmp.ne.s32.totalorder %s118, %s119
    %p130 = scmp.eq.s32.totalorder %s16, 0
    %p131 = por %p129, %p130
    %p132 = scmp.ne.s32.totalorder %s118, %s119
    %p133 = scmp.eq.s32.totalorder %s17, 1
    %p134 = por %p132, %p133
    %p136 = scmp.ne.s32.totalorder %s119, %s135
    %p137 = scmp.eq.s32.totalorder %s17, 0
    %p138 = por %p136, %p137
    %p139 = scmp.le.s32.totalorder 1, %s11
    %p140 = scmp.lt.s32.totalorder %s11, 3
    %p141 = pnand %p139, %p140
    %p142 = pneg %p141
    // Predicated region
    $region9: #{_soft_detection_jit.1} parent=5 // pred_check
      _
    $region10: #{_soft_detection_jit.1} parent=5 // pred_check_branch
      %144 = sbr.rel (%p141) target = $region12
    $region11: #{_soft_detection_jit.1} parent=5 // pred_region
      %s145 = ssub.s32 %s11, 1
      // Predicated region
      $region13: #{_soft_detection_jit.1} parent=11 // pred_check
        %p146 = pneg %p58
      $region14: #{_soft_detection_jit.1} parent=11 // pred_check_branch
        %148 = sbr.rel (%p146) target = $region16
      $region15: #{_soft_detection_jit.1} parent=11 // pred_region
        _
      $region16: #{_soft_detection_jit.1} parent=11 // pred_fallthru
        _
      // Predicated region
      $region17: #{_soft_detection_jit.1} parent=11 // pred_check
        %p149 = pneg %p79
      $region18: #{_soft_detection_jit.1} parent=11 // pred_check_branch
        %151 = sbr.rel (%p149) target = $region20
      $region19: #{_soft_detection_jit.1} parent=11 // pred_region
        _
      $region20: #{_soft_detection_jit.1} parent=11 // pred_fallthru
        _
    $region12: #{_soft_detection_jit.1} parent=5 // pred_fallthru
      _
    %p152 = scmp.lt.s32.totalorder %s11, 2
    // Predicated region
    $region21: #{_soft_detection_jit.1} parent=5 // pred_check
      %p153 = pneg %p152
    $region22: #{_soft_detection_jit.1} parent=5 // pred_check_branch
      %155 = sbr.rel (%p153) target = $region24
    $region23: #{_soft_detection_jit.1} parent=5 // pred_region
      // Predicated region
      $region25: #{_soft_detection_jit.1} parent=23 // pred_check
        %p156 = pneg %p31
      $region26: #{_soft_detection_jit.1} parent=23 // pred_check_branch
        %158 = sbr.rel (%p156) target = $region28
      $region27: #{_soft_detection_jit.1} parent=23 // pred_region
        %p159 = scmp.lt.s32.totalorder %s11, 1
        %s160 = scalar_select %p159, %s11, 1
        %s161 = smul.addr %s160, 2
        %s162 = smul.addr %s161, 4
        %s163 = scalar_lea.vmem %s0, %s162
      $region28: #{_soft_detection_jit.1} parent=23 // pred_fallthru
        _
    $region24: #{_soft_detection_jit.1} parent=5 // pred_fallthru
      _
    %p164 = scmp.le.s32.totalorder 1, %s11
    %p165 = scmp.lt.s32.totalorder %s11, 3
    %p166 = pnand %p164, %p165
    %p167 = pneg %p166
    // Predicated region
    $region29: #{_soft_detection_jit.1} parent=5 // pred_check
      _
    $region30: #{_soft_detection_jit.1} parent=5 // pred_check_branch
      %169 = sbr.rel (%p166) target = $region32
    $region31: #{_soft_detection_jit.1} parent=5 // pred_region
      %s170 = ssub.s32 %s11, 1
      %p171 = scmp.lt.s32.totalorder %s16, 1
      %s172 = scalar_select %p171, %s16, 1
      %s173 = smul.addr %s172, 2
      %s174 = smul.addr %s173, 4
      %s175 = scalar_lea.vmem %s0, %s174
      %p176 = pneg %p37
      %p177 = pneg %p34
      %p178 = pneg %p58
      %p179 = pneg %p55
      %p180 = pneg %p79
      %p181 = pneg %p76
      %p182 = pneg %p105
      %p183 = pneg %p102
      %p184 = scmp.lt.s32.totalorder %s16, 1
      %s185 = scalar_select %p184, %s16, 1
      %s186 = smul.addr %s185, 2
      %s187 = scalar_lea.vmem %s3, %s186
      %p188 = pneg %p131
      %p189 = pneg %p128
      %p190 = scmp.lt.s32.totalorder %s16, 1
      %s191 = scalar_select %p190, %s16, 1
      %s192 = smul.addr %s191, 2
      %s193 = scalar_lea.vmem %s4, %s192
      %p194 = scmp.lt.s32.totalorder %s16, 1
      %s195 = scalar_select %p194, %s16, 1
      %s196 = smul.addr %s195, 2
      %s197 = smul.addr %s196, 4
      %s198 = scalar_lea.vmem %s0, %s197
      %p199 = scmp.lt.s32.totalorder %s16, 1
      %s200 = scalar_select %p199, %s16, 1
      %s201 = smul.addr %s200, 2
      %s202 = scalar_lea.vmem %s3, %s201
      %p203 = scmp.lt.s32.totalorder %s16, 1
      %s204 = scalar_select %p203, %s16, 1
      %s205 = smul.addr %s204, 2
      %s206 = scalar_lea.vmem %s4, %s205
      %v207 = vld [vmem:[%s1] sm:$0x3]
      %v208 = vld [vmem:[%s2] sm:$0x3]
      %vm209 = vcmp.eq.s32.totalorder %v207, 0
      %vm210 = vcmp.eq.s32.totalorder %v207, 15
      %vm211 = vcmp.eq.s32.totalorder %v208, 0
      %vm212 = vcmp.eq.s32.totalorder %v208, 15
      %v213 = vlaneseq
      %v214 = vshrl.u32 %v213, 7
      %s215 = smul.u32 0, 2
      %s216 = smul.addr %s215, 4
      %s217 = scalar_lea.vmem %s198, %s216
      %v218 = vld [vmem:[%s217] sm:$0xff]
      %v219 = vmax.f32 %v218, 0.0
      %221 = vst [vmem:[#allocation1] ss:$2 sm:$0xff] %v219
      %v222 = vld.sshfl [vmem:[#allocation1] sm:$0xff pattern:$0x75316420]
      %v223 = vld.sshfl [vmem:[#allocation1 + $0x8] sm:$0xff pattern:$0x75316420]
      %vm226 = vcmask 1043456
      %v227 = vsel %vm226, %v222, -inf
      %v228 = vrot.slane %v227, 4
      %v229 = vmax.f32 %v227, %v228
      %v230 = vrot.slane %v229, 2
      %v231 = vmax.f32 %v229, %v230
      %v232 = vrot.slane %v231, 1
      %v233 = vmax.f32 %v231, %v232
      %v234 = vsel %vm226, %v223, -inf
      %v235 = vrot.slane %v234, 4
      %v236 = vmax.f32 %v234, %v235
      %v237 = vrot.slane %v236, 2
      %v238 = vmax.f32 %v236, %v237
      %v239 = vrot.slane %v238, 1
      %v240 = vmax.f32 %v238, %v239
      %v243 = vrot.slane %v240, 4
      %v244 = vsel %vm226, %v233, %v243
      %vm246 = vcmp.eq.f32.partialorder %v219, %v244
      %v248 = vunpack.c.l.s4 839922192
      %v249 = vunpack.c.0.s8 %v248
      %v250 = vperm.slane %v214, %v249
      %v251 = vsel %vm246, %v250, 4
      %252 = vst [vmem:[#allocation1] ss:$2 sm:$0xff] %v251
      %v253 = vld.sshfl [vmem:[#allocation1] sm:$0xff pattern:$0x75316420]
      %v254 = vld.sshfl [vmem:[#allocation1 + $0x8] sm:$0xff pattern:$0x75316420]
      %v255 = vsel %vm226, %v253, 2147483647
      %v256 = vrot.slane %v255, 4
      %vm257 = vcmp.lt.s32.totalorder %v255, %v256
      %v258 = vsel %vm257, %v255, %v256
      %v259 = vrot.slane %v258, 2
      %vm260 = vcmp.lt.s32.totalorder %v258, %v259
      %v261 = vsel %vm260, %v258, %v259
      %v262 = vrot.slane %v261, 1
      %vm263 = vcmp.lt.s32.totalorder %v261, %v262
      %v264 = vsel %vm263, %v261, %v262
      %v265 = vsel %vm226, %v254, 2147483647
      %v266 = vrot.slane %v265, 4
      %vm267 = vcmp.lt.s32.totalorder %v265, %v266
      %v268 = vsel %vm267, %v265, %v266
      %v269 = vrot.slane %v268, 2
      %vm270 = vcmp.lt.s32.totalorder %v268, %v269
      %v271 = vsel %vm270, %v268, %v269
      %v272 = vrot.slane %v271, 1
      %vm273 = vcmp.lt.s32.totalorder %v271, %v272
      %v274 = vsel %vm273, %v271, %v272
      %vm275 = vcmp.gt.f32.partialorder %v233, -1.0
      %vm276 = vcmp.gt.f32.partialorder %v240, -1.0
      %v277 = vsel %vm275, %v233, -1.0
      %v278 = vsel %vm276, %v240, -1.0
      %v279 = vsel %vm275, %v264, 0
      %v280 = vsel %vm276, %v274, 0
      %v281 = vmax.f32 %v277, %v278
      %282 = vmax.xlane.f32.xlu0 %v281
      %v283 = vpop.xlane.xlu0 %282
      %s284 = vtos %v283
      %v285 = vstv %s284
      %v286 = vrcp.pop %v285
      %v287 = vmul.f32 %v285, %v286
      %v288 = vsub.f32 1.0, %v287
      %v289 = vmul.f32 %v286, %v288
      %v290 = vadd.f32 %v286, %v289
      %vm291 = vweird.f32 %v285
      %vm292 = vweird.f32 %v286
      %vm293 = vmor %vm291, %vm292
      %v294 = vsel %vm293, %v286, %v290
      %v295 = vand.u32 2147483647, %v285
      %vm296 = vcmp.eq.f32.partialorder %v295, 8.507059e+37
      %v297 = vand.u32 %v285, 2147483648
      %v298 = vor.u32 1.1754944e-38, %v297
      %v299 = vsel %vm296, %v298, %v294
      %s300 = vtos %v299
      %v301 = vrcp.pop %v277
      %v302 = vmul.f32 %v277, %v301
      %v303 = vsub.f32 1.0, %v302
      %v304 = vmul.f32 %v301, %v303
      %v305 = vadd.f32 %v301, %v304
      %vm306 = vweird.f32 %v277
      %vm307 = vweird.f32 %v301
      %vm308 = vmor %vm306, %vm307
      %v309 = vsel %vm308, %v301, %v305
      %v310 = vand.u32 2147483647, %v277
      %vm311 = vcmp.eq.f32.partialorder %v310, 8.507059e+37
      %v312 = vand.u32 %v277, 2147483648
      %v313 = vor.u32 1.1754944e-38, %v312
      %v314 = vsel %vm311, %v313, %v309
      %v315 = vmul.f32 1.0, %v314
      %v316 = vrcp.pop %v278
      %v317 = vmul.f32 %v278, %v316
      %v318 = vsub.f32 1.0, %v317
      %v319 = vmul.f32 %v316, %v318
      %v320 = vadd.f32 %v316, %v319
      %vm321 = vweird.f32 %v278
      %vm322 = vweird.f32 %v316
      %vm323 = vmor %vm321, %vm322
      %v324 = vsel %vm323, %v316, %v320
      %v325 = vand.u32 2147483647, %v278
      %vm326 = vcmp.eq.f32.partialorder %v325, 8.507059e+37
      %v327 = vand.u32 %v278, 2147483648
      %v328 = vor.u32 1.1754944e-38, %v327
      %v329 = vsel %vm326, %v328, %v324
      %v330 = vmul.f32 1.0, %v329
      %v331 = vstv %s300
      %v332 = vmul.f32 %v219, %v331
      %v333 = vmul.f32 %v332, 1.442695
      %v334 = vpow.pop %v333
      %336 = vst [vmem:[#allocation1] ss:$2 sm:$0xff] %v334
      %v337 = vld.sshfl [vmem:[#allocation1 + $0x8] sm:$0xff pattern:$0x75316420]
      %338 = vrot.lane.b32.xlu0 %v337, 1
      %v339 = vpop.permute.xlu0 %338
      %341 = vst [vmem:[#allocation1] ss:$2 sm:$0xff] %v334
      %v342 = vld.sshfl [vmem:[#allocation1] sm:$0xff pattern:$0x75316420]
      %v343 = vld.sshfl [vmem:[#allocation1 + $0x8] sm:$0xff pattern:$0x75316420]
      %344 = vrot.lane.b32.xlu0 %v342, 1
      %v345 = vpop.permute.xlu0 %344
      %346 = vrot.lane.b32.xlu0 %v343, 1
      %v347 = vpop.permute.xlu0 %346
      %vm348 = vcmask 7168
      %v349 = vsel %vm348, %v345, %v347
      %v352 = vsel %vm348, %v339, %v345
      %353 = vst [vmem:[#allocation1] ss:$2 sm:$0xff] %v334
      %v354 = vld.sshfl [vmem:[#allocation1] sm:$0xff pattern:$0x75316420]
      %v355 = vld.sshfl [vmem:[#allocation1 + $0x8] sm:$0xff pattern:$0x75316420]
      %356 = vrot.lane.b32.xlu0 %v354, 127
      %v357 = vpop.permute.xlu0 %356
      %358 = vrot.lane.b32.xlu0 %v355, 127
      %v359 = vpop.permute.xlu0 %358
      %vm360 = vcmask 1039360
      %v361 = vsel %vm360, %v357, %v359
      %364 = vst [vmem:[#allocation1] ss:$2 sm:$0xff] %v334
      %v365 = vld.sshfl [vmem:[#allocation1] sm:$0xff pattern:$0x75316420]
      %366 = vrot.lane.b32.xlu0 %v365, 127
      %v367 = vpop.permute.xlu0 %366
      %v369 = vsel %vm360, %v359, %v367
      %v370 = vsel %vm209, 1, 0
      %v371 = vperm.slane %v370, 0
      %v372 = vperm.slane %v370, 1
      %vm373 = vcmp.eq.s32.totalorder %v371, 1
      %vm374 = vcmp.eq.s32.totalorder %v372, 1
      %v375 = vsel %vm373, 1.0, %v352
      %v376 = vsel %vm374, 1.0, %v349
      %v379 = vrot.slane %v376, 4
      %v380 = vsel %vm226, %v375, %v379
      %v382 = vadd.f32 %v334, %v380
      %v383 = vsel %vm210, 1, 0
      %v384 = vperm.slane %v383, 0
      %v385 = vperm.slane %v383, 1
      %vm386 = vcmp.eq.s32.totalorder %v384, 1
      %vm387 = vcmp.eq.s32.totalorder %v385, 1
      %v388 = vsel %vm386, 1.0, %v361
      %v389 = vsel %vm387, 1.0, %v369
      %v392 = vrot.slane %v389, 4
      %v393 = vsel %vm226, %v388, %v392
      %v395 = vadd.f32 %v382, %v393
      %397 = vst [vmem:[#allocation1] ss:$2 sm:$0xff] %v395
      %v398 = vld.sshfl [vmem:[#allocation1 + $0x8] sm:$0xff pattern:$0x75316420]
      %399 = vrot.lane.b32.xlu0 %v398, 16
      %v400 = vpop.permute.xlu0 %399
      %402 = vst [vmem:[#allocation1] ss:$2 sm:$0xff] %v395
      %v403 = vld.sshfl [vmem:[#allocation1] sm:$0xff pattern:$0x75316420]
      %v404 = vld.sshfl [vmem:[#allocation1 + $0x8] sm:$0xff pattern:$0x75316420]
      %405 = vrot.lane.b32.xlu0 %v403, 16
      %v406 = vpop.permute.xlu0 %405
      %407 = vrot.lane.b32.xlu0 %v404, 16
      %v408 = vpop.permute.xlu0 %407
      %vm409 = vcmask 130048
      %v410 = vsel %vm409, %v406, %v408
      %v413 = vsel %vm409, %v400, %v406
      %414 = vst [vmem:[#allocation1] ss:$2 sm:$0xff] %v395
      %v415 = vld.sshfl [vmem:[#allocation1] sm:$0xff pattern:$0x75316420]
      %v416 = vld.sshfl [vmem:[#allocation1 + $0x8] sm:$0xff pattern:$0x75316420]
      %417 = vrot.lane.b32.xlu0 %v415, 112
      %v418 = vpop.permute.xlu0 %417
      %419 = vrot.lane.b32.xlu0 %v416, 112
      %v420 = vpop.permute.xlu0 %419
      %vm421 = vcmask 916480
      %v422 = vsel %vm421, %v418, %v420
      %425 = vst [vmem:[#allocation1] ss:$2 sm:$0xff] %v395
      %v426 = vld.sshfl [vmem:[#allocation1] sm:$0xff pattern:$0x75316420]
      %427 = vrot.lane.b32.xlu0 %v426, 112
      %v428 = vpop.permute.xlu0 %427
      %v430 = vsel %vm421, %v420, %v428
      %v431 = vsel %vm211, 1, 0
      %v432 = vperm.slane %v431, 0
      %v433 = vperm.slane %v431, 1
      %vm434 = vcmp.eq.s32.totalorder %v432, 1
      %vm435 = vcmp.eq.s32.totalorder %v433, 1
      %v436 = vsel %vm434, 3.0, %v413
      %v437 = vsel %vm435, 3.0, %v410
      %v440 = vrot.slane %v437, 4
      %v441 = vsel %vm226, %v436, %v440
      %v443 = vadd.f32 %v395, %v441
      %v444 = vsel %vm212, 1, 0
      %v445 = vperm.slane %v444, 0
      %v446 = vperm.slane %v444, 1
      %vm447 = vcmp.eq.s32.totalorder %v445, 1
      %vm448 = vcmp.eq.s32.totalorder %v446, 1
      %v449 = vsel %vm447, 3.0, %v422
      %v450 = vsel %vm448, 3.0, %v430
      %v453 = vrot.slane %v450, 4
      %v454 = vsel %vm226, %v449, %v453
      %v456 = vadd.f32 %v443, %v454
      %v457 = vrcp.pop %v456
      %v458 = vmul.f32 %v456, %v457
      %v459 = vsub.f32 1.0, %v458
      %v460 = vmul.f32 %v457, %v459
      %v461 = vadd.f32 %v457, %v460
      %vm462 = vweird.f32 %v456
      %vm463 = vweird.f32 %v457
      %vm464 = vmor %vm462, %vm463
      %v465 = vsel %vm464, %v457, %v461
      %v466 = vand.u32 2147483647, %v456
      %vm467 = vcmp.eq.f32.partialorder %v466, 8.507059e+37
      %v468 = vand.u32 %v456, 2147483648
      %v469 = vor.u32 1.1754944e-38, %v468
      %v470 = vsel %vm467, %v469, %v465
      %v471 = vmul.f32 1.0, %v470
      %v472 = vmul.f32 %v334, %v471
      %v475 = vrot.slane %v330, 4
      %v476 = vsel %vm226, %v315, %v475
      %v478 = vmul.f32 %v219, %v476
      %v479 = vmul.f32 %v472, %v478
      %481 = vst [vmem:[#allocation1] ss:$2 sm:$0xff] %v479
      %v482 = vld.sshfl [vmem:[#allocation1] sm:$0xff pattern:$0x75316420]
      %v483 = vld.sshfl [vmem:[#allocation1 + $0x8] sm:$0xff pattern:$0x75316420]
      %v486 = vsel %vm226, %v482, -inf
      %v487 = vrot.slane %v486, 4
      %v488 = vmax.f32 %v486, %v487
      %v489 = vrot.slane %v488, 2
      %v490 = vmax.f32 %v488, %v489
      %v491 = vrot.slane %v490, 1
      %v492 = vmax.f32 %v490, %v491
      %v493 = vsel %vm226, %v483, -inf
      %v494 = vrot.slane %v493, 4
      %v495 = vmax.f32 %v493, %v494
      %v496 = vrot.slane %v495, 2
      %v497 = vmax.f32 %v495, %v496
      %v498 = vrot.slane %v497, 1
      %v499 = vmax.f32 %v497, %v498
      %v500 = vmax.f32 %v492, 0.0
      %v501 = vmax.f32 %v499, 0.0
      %vm502 = vcmask 1040384
      %v503 = vsel %vm502, %v500, 0.0
      %v504 = vsel %vm502, %v501, 0.0
      %v505 = vadd.f32 %v503, %v504
      %506 = vadd.xlane.f32.xlu0 %v505
      %v507 = vpop.xlane.xlu0 %506
      %v508 = vrot.slane %v507, 4
      %v509 = vadd.f32 %v507, %v508
      %v510 = vrot.slane %v509, 2
      %v511 = vadd.f32 %v509, %v510
      %v512 = vrot.slane %v511, 1
      %v513 = vadd.f32 %v511, %v512
      %s514 = vtos %v513
      %v515 = vstv %s514
      %v516 = vrcp.pop %v515
      %v517 = vmul.f32 %v515, %v516
      %v518 = vsub.f32 1.0, %v517
      %v519 = vmul.f32 %v516, %v518
      %v520 = vadd.f32 %v516, %v519
      %vm521 = vweird.f32 %v515
      %vm522 = vweird.f32 %v516
      %vm523 = vmor %vm521, %vm522
      %v524 = vsel %vm523, %v516, %v520
      %v525 = vand.u32 2147483647, %v515
      %vm526 = vcmp.eq.f32.partialorder %v525, 8.507059e+37
      %v527 = vand.u32 %v515, 2147483648
      %v528 = vor.u32 1.1754944e-38, %v527
      %v529 = vsel %vm526, %v528, %v524
      %s530 = vtos %v529
      %v531 = vstv %s530
      %v532 = vmul.f32 %v500, %v531
      %v533 = vmul.f32 %v501, %v531
      %v536 = vrot.slane %v533, 7
      %v537 = vsel %vm502, %v532, %v536
      %v539 = vlaneseq
      %vm540 = vcmp.ge.s32.totalorder %v539, 0
      %vm541 = vcmp.lt.s32.totalorder %v539, 256
      %vm542 = vmand %vm540, %vm541
      %543 = vst.msk [vmem:[%s202] sm:$0x3] %vm542, %v537
      %v544 = vrot.slane %v280, 7
      %v545 = vsel %vm502, %v279, %v544
      %546 = vst.msk [vmem:[%s206] sm:$0x3] %vm542, %v545
      %p547 = scmp.lt.s32.totalorder %s16, 1
      %s548 = scalar_select %p547, %s16, 1
      %s549 = smul.addr %s548, 2
      %s550 = scalar_lea.vmem %s3, %s549
      %p551 = scmp.lt.s32.totalorder %s16, 1
      %s552 = scalar_select %p551, %s16, 1
      %s553 = smul.addr %s552, 2
      %s554 = scalar_lea.vmem %s4, %s553
      // Predicated region
      $region33: #{_soft_detection_jit.1} parent=31 // pred_check
        %p555 = pneg %p102
      $region34: #{_soft_detection_jit.1} parent=31 // pred_check_branch
        %557 = sbr.rel (%p555) target = $region36
      $region35: #{_soft_detection_jit.1} parent=31 // pred_region
        _
      $region36: #{_soft_detection_jit.1} parent=31 // pred_fallthru
        _
      // Predicated region
      $region37: #{_soft_detection_jit.1} parent=31 // pred_check
        %p558 = pneg %p128
      $region38: #{_soft_detection_jit.1} parent=31 // pred_check_branch
        %560 = sbr.rel (%p558) target = $region40
      $region39: #{_soft_detection_jit.1} parent=31 // pred_region
        _
      $region40: #{_soft_detection_jit.1} parent=31 // pred_fallthru
        _
    $region32: #{_soft_detection_jit.1} parent=5 // pred_fallthru
      _
    %p561 = scmp.le.s32.totalorder 2, %s11
    // Predicated region
    $region41: #{_soft_detection_jit.1} parent=5 // pred_check
      %p562 = pneg %p561
    $region42: #{_soft_detection_jit.1} parent=5 // pred_check_branch
      %564 = sbr.rel (%p562) target = $region44
    $region43: #{_soft_detection_jit.1} parent=5 // pred_region
      %s565 = ssub.s32 %s11, 2
      // Predicated region
      $region45: #{_soft_detection_jit.1} parent=43 // pred_check
        %p566 = pneg %p108
      $region46: #{_soft_detection_jit.1} parent=43 // pred_check_branch
        %568 = sbr.rel (%p566) target = $region48
      $region47: #{_soft_detection_jit.1} parent=43 // pred_region
        %p569 = scmp.lt.s32.totalorder %s17, 1
        %s570 = scalar_select %p569, %s17, 1
        %s571 = smul.addr %s570, 2
        %s572 = scalar_lea.vmem %s3, %s571
      $region48: #{_soft_detection_jit.1} parent=43 // pred_fallthru
        _
      // Predicated region
      $region49: #{_soft_detection_jit.1} parent=43 // pred_check
        %p573 = pneg %p134
      $region50: #{_soft_detection_jit.1} parent=43 // pred_check_branch
        %575 = sbr.rel (%p573) target = $region52
      $region51: #{_soft_detection_jit.1} parent=43 // pred_region
        %p576 = scmp.lt.s32.totalorder %s17, 1
        %s577 = scalar_select %p576, %s17, 1
        %s578 = smul.addr %s577, 2
        %s579 = scalar_lea.vmem %s4, %s578
      $region52: #{_soft_detection_jit.1} parent=43 // pred_fallthru
        _
    $region44: #{_soft_detection_jit.1} parent=5 // pred_fallthru
      _
  $region6: #{_soft_detection_jit.1} parent=0 // loop_footer
    %s15 = sadd.s32 1, %s11
  $region7: #{_soft_detection_jit.1} parent=0 // loop_footer_branch
    %10 = sbr.rel target = $region3
  $region8: #{_soft_detection_jit.1} parent=0 // loop_exit
    _

</llo_original>
